<compile_context>
chip_gen: v7x
topology: tpu7x:2x2x1
jax: 0.10.0
libtpu: 0.0.40
codegen_flags: <defaults>
</compile_context>

<pallas_src>
import jax
import jax.numpy as jnp
from jax.experimental import pallas as pl
from jax.experimental.pallas import tpu as pltpu

_LANE = 128


def _relu2_kernel(x_ref, o_ref):
    x = x_ref[...]
    r = jnp.maximum(x, jnp.zeros_like(x))
    o_ref[...] = r * r


def _sublane_multiple(dtype) -> int:
    # Minimum sublane tile: 8 for 32-bit, 16 for 16-bit, 32 for 8-bit dtypes.
    itemsize = jnp.dtype(dtype).itemsize
    return max(8, 32 // max(itemsize, 1))


def _round_up(a: int, b: int) -> int:
    return ((a + b - 1) // b) * b


def _target_block_bytes() -> int:
    # Constant-byte block target, sized per chip generation:
    #   v7x : 6 MiB blocks amortize ~0.35 us/step overhead at ~3.2 TB/s;
    #         2x in + 2x out = 24 MiB, well under 64 MiB physical VMEM.
    #   v6e : 4 MiB blocks -> 16 MiB buffering, fits the 32 MiB scoped default.
    #   v5e / unknown: conservative 2 MiB blocks (8 MiB buffering, well under
    #         the 16 MiB scoped-VMEM default; bigger tiles buy nothing there).
    try:
        kind = jax.devices()[0].device_kind.lower()
    except Exception:
        return 2 << 20
    if "v7" in kind:
        return 6 << 20
    if "v6" in kind:
        return 4 << 20
    return 2 << 20


def relu2(x: jax.Array, *, donate: bool = False) -> jax.Array:
    """Elementwise relu(x)**2 via a Pallas TPU kernel. Accepts any shape/dtype."""
    orig_shape = x.shape
    dtype = x.dtype
    n = x.size
    if n == 0:
        return x

    itemsize = jnp.dtype(dtype).itemsize

    # Pick a lane-dense 2-D view without adding extra HBM passes:
    #  * last dim already a multiple of 128 -> collapse leading dims only
    #    (free; the minor/lane dimension is untouched).
    #  * else, if the flat size is a multiple of 128 -> flat (rows, 128) view.
    #  * else (ragged tail): plain fused XLA relu**2 is one HBM pass — strictly
    #    cheaper than pad + kernel + slice for a bandwidth-bound op.
    if x.ndim >= 2 and orig_shape[-1] % _LANE == 0:
        cols = orig_shape[-1]
        x2d = x.reshape(-1, cols)
    elif n % _LANE == 0:
        cols = _LANE
        x2d = x.reshape(-1, _LANE)
    else:
        r = jnp.maximum(x, 0)
        return r * r

    rows = x2d.shape[0]
    sub = _sublane_multiple(dtype)
    target = _target_block_bytes()

    # Column (lane) tile: full width unless a single sublane group of rows
    # already blows the byte budget (very wide trailing dims).
    if cols * sub * itemsize <= target:
        tc = cols
    else:
        tc = max(_LANE, (target // (sub * itemsize)) // _LANE * _LANE)
        tc = min(tc, cols)

    # Row (sublane) tile from the constant byte budget.
    tr = max(sub, (target // (tc * itemsize)) // sub * sub)

    # Guarantee enough grid steps that (a) the input DMA of step i+1 and the
    # writeback of step i-1 overlap compute, and (b) both v7x TCs get work.
    total_bytes = n * itemsize
    if total_bytes >= (1 << 20):
        min_blocks = 4
    elif total_bytes >= (256 << 10):
        min_blocks = 2
    else:
        min_blocks = 1
    n_col_blocks = pl.cdiv(cols, tc)
    need_row_blocks = pl.cdiv(min_blocks, n_col_blocks)
    if need_row_blocks > 1:
        tr = min(tr, max(sub, _round_up(pl.cdiv(rows, need_row_blocks), sub)))

    if tr >= rows:
        tr = rows  # full extent: exempt from the 8-row divisibility rule
    if tc >= cols:
        tc = cols

    grid = (pl.cdiv(rows, tr), pl.cdiv(cols, tc))

    cost = pl.CostEstimate(
        flops=2 * n, transcendentals=0, bytes_accessed=2 * n * itemsize
    )

    cp_kwargs = dict(dimension_semantics=("parallel", "parallel"))
    if tr * tc * itemsize > (4 << 20):
        # v7x-sized tiles: make the scoped-VMEM request explicit (2x in + 2x out
        # buffers plus headroom), still well under 64 MiB physical.
        cp_kwargs["vmem_limit_bytes"] = 40 << 20

    out2d = pl.pallas_call(
        _relu2_kernel,
        out_shape=jax.ShapeDtypeStruct(x2d.shape, dtype),
        grid_spec=pltpu.PrefetchScalarGridSpec(
            num_scalar_prefetch=0,
            grid=grid,
            in_specs=[pl.BlockSpec((tr, tc), lambda i, j: (i, j))],
            out_specs=pl.BlockSpec((tr, tc), lambda i, j: (i, j)),
        ),
        compiler_params=pltpu.CompilerParams(**cp_kwargs),
        cost_estimate=cost,
        # Only alias when the caller actually donates x; otherwise XLA would
        # insert a defensive copy (an extra HBM pass).
        input_output_aliases={0: 0} if donate else {},
    )(x2d)

    return out2d.reshape(orig_shape)


if __name__ == "__main__":
    key = jax.random.PRNGKey(0)

    # Primary check: NCHW f32, matches the PyTorch module's forward.
    x = jax.random.normal(key, (2, 4, 16, 16), dtype=jnp.float32)
    y = relu2(x)
    jax.block_until_ready(y)
    y_ref = jnp.maximum(x, 0.0) ** 2
    assert y.shape == x.shape and y.dtype == x.dtype
    assert jnp.allclose(y, y_ref, atol=1e-6, rtol=1e-6)

    k1, k2, k3 = jax.random.split(key, 3)

    # Non-128-aligned size (ragged tail -> fused XLA fallback path).
    xu = jax.random.normal(k1, (5, 37), dtype=jnp.float32)
    yu = relu2(xu)
    jax.block_until_ready(yu)
    assert jnp.allclose(yu, jnp.maximum(xu, 0.0) ** 2, atol=1e-6, rtol=1e-6)

    # bf16 (packed-dtype tiling, constant-byte block).
    xb = jax.random.normal(k2, (2, 4, 16, 16), dtype=jnp.bfloat16)
    yb = relu2(xb)
    jax.block_until_ready(yb)
    assert yb.dtype == jnp.bfloat16
    assert jnp.allclose(
        yb.astype(jnp.float32),
        (jnp.maximum(xb, 0) ** 2).astype(jnp.float32),
        atol=1e-2,
        rtol=1e-2,
    )

    # Lane-friendly 2-D input big enough to exercise the multi-block pipeline.
    xl = jax.random.normal(k3, (512, 1024), dtype=jnp.float32)
    yl = relu2(xl)
    jax.block_until_ready(yl)
    assert jnp.allclose(yl, jnp.maximum(xl, 0.0) ** 2, atol=1e-6, rtol=1e-6)

    print("KERNEL_OK")
</pallas_src>

<mosaic_0001>
module attributes {stable_mosaic.version = 11 : i64} {
  func.func @_relu2_kernel(%arg0: i32, %arg1: i32, %arg2: memref<16x128xf32, #tpu.memory_space<vmem>>, %arg3: memref<16x128xf32, #tpu.memory_space<vmem>>) attributes {dimension_semantics = [#tpu.dimension_semantics<parallel>, #tpu.dimension_semantics<parallel>], iteration_bounds = array<i64: 1, 1>, scalar_prefetch = 0 : i64, scratch_operands = 0 : i64, tpu.core_type = #tpu.core_type<tc>, window_params = [{transform_indices = @transform_0, window_bounds = array<i64: 16, 128>}, {transform_indices = @transform_1, window_bounds = array<i64: 16, 128>}]} {
    %c0 = arith.constant 0 : index
    %c0_0 = arith.constant 0 : index
    %0 = vector.load %arg2[%c0, %c0_0] : memref<16x128xf32, #tpu.memory_space<vmem>>, vector<16x128xf32>
    %cst = arith.constant 0.000000e+00 : f32
    %1 = vector.broadcast %cst : f32 to vector<16x128xf32>
    %2 = arith.maximumf %0, %1 : vector<16x128xf32>
    %3 = arith.mulf %2, %2 : vector<16x128xf32>
    %c0_1 = arith.constant 0 : index
    %c0_2 = arith.constant 0 : index
    %4 = vector.load %arg3[%c0_1, %c0_2] : memref<16x128xf32, #tpu.memory_space<vmem>>, vector<16x128xf32>
    tpu.vector_store %arg3[%c0_1, %c0_2], %3 {strides = array<i32>} : memref<16x128xf32, #tpu.memory_space<vmem>>, vector<16x128xf32>,
    return
  }
  func.func @transform_0(%arg0: i32, %arg1: i32) -> (i32, i32) {
    %c0_i32 = arith.constant 0 : i32
    return %arg0, %arg1 : i32, i32
  }
  func.func @transform_1(%arg0: i32, %arg1: i32) -> (i32, i32) {
    %c0_i32 = arith.constant 0 : i32
    return %arg0, %arg1 : i32, i32
  }
}

</mosaic_0001>

<llo_original>
// kernel: tpu_custom_call.1
$region0: #{tpu_custom_call.1}
  #allocation0 [shape = 'u32[]', space=smem, size = 0x4, offset = 0x4, fixed_abs, tag = 'smem constant byte address 0x4 - core index']
  #allocation1 [shape = 'u32[144,128]{1,0:T(1,128)}', space=vmem, size = 0x12000, scoped, tag = 'internal scratch']
  %s0 = inlined_call_operand.hbm [shape: f32[16,128], index: 0, kind: input, shape index: {}]
  %s1 = inlined_call_operand.hbm [shape: f32[16,128], index: 1, kind: output, shape index: {}]
  %s2 = sld [smem:[#allocation0]]
  $region18: #{tpu_custom_call.1} parent=0
    _
  %s4 = ssub.s32 1, %s2
  %s5 = scalar_select 0, %s4, %s2
  $region1: #{tpu_custom_call.1} parent=0
    #allocation2 [shape = 'u8[8192]{0}', space=vmem, size = 0x2000, scoped, tag = 'input window, operand 0, single buffered']
    #allocation3 [shape = 's32[1]{0}', space=sflag, size = 0x4, scoped, tag = 'scoped memory for tpu_custom_call.1']
    #allocation4 [shape = 's32[1]{0}', space=sflag, size = 0x4, scoped, tag = 'scoped memory for tpu_custom_call.1']
    #allocation5 [shape = 'u8[8192]{0}', space=vmem, size = 0x2000, scoped, tag = 'output window, operand 0, single buffered']
    %6 = vsyncpa [#allocation3], 0
    %7 = vsyncpa [#allocation4], 0
    // Predicated region
    $region2: #{tpu_custom_call.1} parent=1 // pred_check
      _
    $region3: #{tpu_custom_call.1} parent=1 // pred_check_branch
      %9 = sbr.rel (0) target = $region5
    $region4: #{tpu_custom_call.1} parent=1 // pred_region
      %s11 = ssub.s32 256, 256
      %12 = vsyncadd [#allocation3], %s11
      %s13 = sshll.u32 [#allocation2], 4
      %s14 = int_to_ptr.vmem [resolvable:$true] %s13
      %19 = dma.hbm_to_vmem [thread:$0]  %s0, 256, %s14, [#allocation3], 128, 128, 8
    $region5: #{tpu_custom_call.1} parent=1 // pred_fallthru
      _
    // Predicated region
    $region6: #{tpu_custom_call.1} parent=1 // pred_check
      _
    $region7: #{tpu_custom_call.1} parent=1 // pred_check_branch
      %21 = sbr.rel (0) target = $region9
    $region8: #{tpu_custom_call.1} parent=1 // pred_region
      %22 = dma.done [#allocation3], 256
    $region9: #{tpu_custom_call.1} parent=1 // pred_fallthru
      _
    %v23 = vld [vmem:[#allocation2] sm:$0xff]
    %v24 = vld [vmem:[#allocation2 + $0x8] sm:$0xff]
    %v25 = vmax.f32 %v23, 0.0
    %v26 = vmax.f32 %v24, 0.0
    %v27 = vmul.f32 %v25, %v25
    %v28 = vmul.f32 %v26, %v26
    %29 = vst [vmem:[#allocation5] sm:$0xff] %v27
    %30 = vst [vmem:[#allocation5 + $0x8] sm:$0xff] %v28
    // Predicated region
    $region10: #{tpu_custom_call.1} parent=1 // pred_check
      _
    $region11: #{tpu_custom_call.1} parent=1 // pred_check_branch
      %32 = sbr.rel (0) target = $region13
    $region12: #{tpu_custom_call.1} parent=1 // pred_region
      %s34 = ssub.s32 256, 256
      %35 = vsyncadd [#allocation4], %s34
      %s36 = sshll.u32 [#allocation5], 4
      %s37 = int_to_ptr.vmem [resolvable:$true] %s36
      %42 = dma.vmem_to_hbm [thread:$0]  %s37, 256, %s1, [#allocation4], 128, 128, 8
    $region13: #{tpu_custom_call.1} parent=1 // pred_fallthru
      _
    // Predicated region
    $region14: #{tpu_custom_call.1} parent=1 // pred_check
      _
    $region15: #{tpu_custom_call.1} parent=1 // pred_check_branch
      %44 = sbr.rel (0) target = $region17
    $region16: #{tpu_custom_call.1} parent=1 // pred_region
      %45 = dma.done [#allocation4], 256
    $region17: #{tpu_custom_call.1} parent=1 // pred_fallthru
      _
    %46 = vsyncpa [#allocation3], 1
    %47 = vsyncpa [#allocation4], 1

</llo_original>
